<compile_context>
chip_gen: v6e
topology: v6e:2x2x1
jax: 0.10.0
libtpu: 0.0.40
codegen_flags: <defaults>
</compile_context>

<pallas_src>
import functools

import jax
import jax.numpy as jnp
from jax.experimental import pallas as pl
from jax.experimental.pallas import tpu as pltpu

BN_EPS = 1e-5


def _round_up(n: int, m: int) -> int:
    return ((n + m - 1) // m) * m


def _pad2(a, rows, cols):
    pr, pc = rows - a.shape[0], cols - a.shape[1]
    return jnp.pad(a, ((0, pr), (0, pc))) if (pr or pc) else a


def _vmem_limit_bytes() -> int:
    """~75% of physical VMEM (96 MiB on v5e/v6e, 48 MiB on v7x), capped at 100 MiB."""
    try:
        cap = int(pltpu.get_tpu_info().vmem_capacity_bytes)
    except Exception:
        cap = 128 * 1024 * 1024
    return min(cap * 3 // 4, 100 * 1024 * 1024)


@functools.lru_cache(maxsize=None)
def _buffered1_supported() -> bool:
    """Probe (once) whether pipeline_mode=pl.Buffered(1) compiles on this build."""
    def k(x_ref, o_ref):
        o_ref[...] = x_ref[...] + 1.0

    try:
        spec = pl.BlockSpec((8, 128), lambda i: (0, 0), pipeline_mode=pl.Buffered(1))
        fn = pl.pallas_call(
            k,
            grid=(2,),
            in_specs=[spec],
            out_specs=pl.BlockSpec((8, 128), lambda i: (i, 0)),
            out_shape=jax.ShapeDtypeStruct((16, 128), jnp.float32),
        )
        jax.jit(fn).lower(jax.ShapeDtypeStruct((8, 128), jnp.float32)).compile()
        return True
    except Exception:
        return False


def _resident_spec(block_shape, index_map):
    """BlockSpec for constant-index_map operands (weights / BN params).

    Single-buffered when supported: they are DMA'd into VMEM once and never
    change, so default double-buffering only doubles their VMEM footprint
    (matters most under v7x's 64 MiB VMEM).
    """
    if _buffered1_supported():
        return pl.BlockSpec(block_shape, index_map, pipeline_mode=pl.Buffered(1))
    return pl.BlockSpec(block_shape, index_map)


# ---------------- pass 1: h = x @ W1 (bf16 out) + per-tile batch stats ----
def _matmul_stats_kernel(x_ref, w1_ref, h_ref, psum_ref, pssq_ref):
    h = jnp.dot(x_ref[...], w1_ref[...], preferred_element_type=jnp.float32)
    h_bf = h.astype(jnp.bfloat16)
    h_ref[...] = h_bf

    # Stats are computed from the *stored* (bf16-rounded) values so the
    # pass-2 normalization exactly matches the statistics.
    hq = h_bf.astype(jnp.float32)
    tb, hp = hq.shape
    hr = hq.reshape(tb // 8, 8, hp)          # split sublane-tile groups
    psum_ref[...] = jnp.sum(hr, axis=0)      # (8, H): pure VPU vreg adds
    pssq_ref[...] = jnp.sum(hr * hr, axis=0)


# -------- pass 2: folded bf16 BN (scale/shift) + ReLU + (h @ W2 + b2) ------
def _bn_relu_matmul_kernel(h_ref, scale_ref, shift_ref, w2_ref, b2_ref, o_ref):
    a = jnp.maximum(h_ref[...] * scale_ref[...] + shift_ref[...], 0.0)  # bf16
    out = jnp.dot(a, w2_ref[...], preferred_element_type=jnp.float32)
    o_ref[...] = out + b2_ref[...]


def mlp_forward(x, w1, gamma, beta, w2, b2, *,
                row_tile: int = 256,
                compute_dtype=jnp.bfloat16):
    """BYOL-projector MLP forward.

    x: (B, D_in) f32.  Weights stored (in, out), i.e. transposed vs PyTorch:
    w1: (D_in, H), w2: (H, D_out).  gamma/beta: (H,) or (1, H); b2: (D_out,)
    or (1, D_out).  Returns (B, D_out) f32.
    """
    B, d_in = x.shape
    hidden = w1.shape[1]
    d_out = w2.shape[1]

    # Lane-dense / MXU-friendly padded dims; row tile multiple of 16 (bf16 tile).
    d_in_p = _round_up(d_in, 128)
    h_p = _round_up(hidden, 128)
    d_out_p = _round_up(d_out, 128)
    tb = min(_round_up(row_tile, 16), _round_up(B, 16))
    b_p = _round_up(B, tb)
    n_tiles = b_p // tb

    xp = _pad2(x, b_p, d_in_p).astype(compute_dtype)
    w1p = _pad2(w1, d_in_p, h_p).astype(compute_dtype)
    w2p = _pad2(w2, h_p, d_out_p).astype(compute_dtype)
    gammap = _pad2(jnp.asarray(gamma, jnp.float32).reshape(1, -1), 1, h_p)
    betap = _pad2(jnp.asarray(beta, jnp.float32).reshape(1, -1), 1, h_p)
    b2p = _pad2(jnp.asarray(b2, jnp.float32).reshape(1, -1), 1, d_out_p)

    vmem_limit = _vmem_limit_bytes()

    # ---- pass 1: h = x @ W1 (bf16), per-tile (8, H) sum / sum-of-squares ----
    h, psum, pssq = pl.pallas_call(
        _matmul_stats_kernel,
        grid=(n_tiles,),
        in_specs=[
            pl.BlockSpec((tb, d_in_p), lambda i: (i, 0)),        # x row tile
            _resident_spec((d_in_p, h_p), lambda i: (0, 0)),     # W1 resident
        ],
        out_specs=[
            pl.BlockSpec((tb, h_p), lambda i: (i, 0)),           # h row tile (bf16)
            pl.BlockSpec((8, h_p), lambda i: (i, 0)),            # partial sum
            pl.BlockSpec((8, h_p), lambda i: (i, 0)),            # partial sumsq
        ],
        out_shape=[
            jax.ShapeDtypeStruct((b_p, h_p), jnp.bfloat16),
            jax.ShapeDtypeStruct((n_tiles * 8, h_p), jnp.float32),
            jax.ShapeDtypeStruct((n_tiles * 8, h_p), jnp.float32),
        ],
        compiler_params=pltpu.CompilerParams(
            dimension_semantics=("parallel",),                   # independent tiles
            vmem_limit_bytes=vmem_limit),
        cost_estimate=pl.CostEstimate(
            flops=2 * b_p * d_in_p * h_p,
            transcendentals=0,
            bytes_accessed=(b_p * d_in_p + d_in_p * h_p + b_p * h_p) * 2
            + 8 * n_tiles * 8 * h_p),
    )(xp, w1p)

    # Tiny O(H) epilogue in plain JAX: fold BN into one multiply-add (bf16).
    n = jnp.float32(B)
    h_sum = jnp.sum(psum, axis=0, keepdims=True)                  # (1, H)
    h_ssq = jnp.sum(pssq, axis=0, keepdims=True)
    mean = h_sum / n
    var = jnp.maximum(h_ssq / n - mean * mean, 0.0)               # biased variance
    inv_std = jax.lax.rsqrt(var + BN_EPS)
    scale_f32 = gammap * inv_std                                  # (1, H)
    shift_f32 = betap - mean * scale_f32                          # (1, H)
    scale = scale_f32.astype(compute_dtype)
    shift = shift_f32.astype(compute_dtype)

    # ---- pass 2: fused bf16 BN + ReLU + second matmul (+ bias) ----
    out = pl.pallas_call(
        _bn_relu_matmul_kernel,
        grid=(n_tiles,),
        in_specs=[
            pl.BlockSpec((tb, h_p), lambda i: (i, 0)),           # h row tile (bf16)
            _resident_spec((1, h_p), lambda i: (0, 0)),          # BN scale (bf16)
            _resident_spec((1, h_p), lambda i: (0, 0)),          # BN shift (bf16)
            _resident_spec((h_p, d_out_p), lambda i: (0, 0)),    # W2 resident
            _resident_spec((1, d_out_p), lambda i: (0, 0)),      # bias resident
        ],
        out_specs=pl.BlockSpec((tb, d_out_p), lambda i: (i, 0)),
        out_shape=jax.ShapeDtypeStruct((b_p, d_out_p), jnp.float32),
        compiler_params=pltpu.CompilerParams(
            dimension_semantics=("parallel",),                   # megacore on v7x
            vmem_limit_bytes=vmem_limit),
        cost_estimate=pl.CostEstimate(
            flops=2 * b_p * h_p * d_out_p + 3 * b_p * h_p,
            transcendentals=0,
            bytes_accessed=2 * b_p * h_p + 2 * h_p * d_out_p + 4 * h_p
            + 4 * d_out_p + 4 * b_p * d_out_p),
    )(h, scale, shift, w2p, b2p)

    return out[:B, :d_out]


def init_params(key, input_dim, hidden_size, output_dim):
    """Deterministic PyTorch-style (kaiming-uniform) init; weights stored (in, out)."""
    k1, k2, k3 = jax.random.split(key, 3)
    bound1 = 1.0 / jnp.sqrt(input_dim)
    w1 = jax.random.uniform(k1, (input_dim, hidden_size), jnp.float32,
                            minval=-bound1, maxval=bound1)
    gamma = jnp.ones((1, hidden_size), jnp.float32)   # BN weight
    beta = jnp.zeros((1, hidden_size), jnp.float32)   # BN bias
    bound2 = 1.0 / jnp.sqrt(hidden_size)
    w2 = jax.random.uniform(k2, (hidden_size, output_dim), jnp.float32,
                            minval=-bound2, maxval=bound2)
    b2 = jax.random.uniform(k3, (1, output_dim), jnp.float32,
                            minval=-bound2, maxval=bound2)
    return w1, gamma, beta, w2, b2


if __name__ == "__main__":
    # Small shapes consistent with the module; feature dims are deliberately
    # non-multiples of 128 (lane-padding path) and the batch is not a multiple
    # of the row tile (batch padding + multi-tile grid).  row_tile=32 keeps
    # blocks at/above the (16, 128) bf16 tile (never use tiny tiles like 8).
    batch, input_dim, hidden_size, output_dim = 56, 96, 192, 48

    key = jax.random.PRNGKey(0)
    kx, kp = jax.random.split(key)
    x = jax.random.normal(kx, (batch, input_dim), jnp.float32)
    w1, gamma, beta, w2, b2 = init_params(kp, input_dim, hidden_size, output_dim)

    fwd = jax.jit(functools.partial(mlp_forward, row_tile=32))
    out = fwd(x, w1, gamma, beta, w2, b2)
    jax.block_until_ready(out)

    # Pure-JAX f32 reference (PyTorch training-mode BN semantics).
    h = x @ w1
    mean = h.mean(axis=0, keepdims=True)
    var = ((h - mean) ** 2).mean(axis=0, keepdims=True)
    ref = jnp.maximum((h - mean) / jnp.sqrt(var + BN_EPS) * gamma + beta, 0.0) @ w2 + b2

    assert out.shape == (batch, output_dim)
    max_err = float(jnp.max(jnp.abs(out - ref)))
    # bf16 intermediate h, bf16 BN affine and bf16 MXU operands (f32 accum)
    # => loosen tolerance vs the pure-f32 reference.
    assert jnp.allclose(out, ref, atol=5e-2, rtol=5e-2), f"max abs err {max_err}"

    print("KERNEL_OK")
</pallas_src>

<mosaic_0001>
module attributes {stable_mosaic.version = 11 : i64} {
  func.func @_matmul_stats_kernel(%arg0: i32, %arg1: memref<32x128xbf16, #tpu.memory_space<vmem>>, %arg2: memref<128x256xbf16, #tpu.memory_space<vmem>>, %arg3: memref<32x256xbf16, #tpu.memory_space<vmem>>, %arg4: memref<8x256xf32, #tpu.memory_space<vmem>>, %arg5: memref<8x256xf32, #tpu.memory_space<vmem>>) attributes {dimension_semantics = [#tpu.dimension_semantics<parallel>], iteration_bounds = array<i64: 2>, scalar_prefetch = 0 : i64, scratch_operands = 0 : i64, tpu.core_type = #tpu.core_type<tc>, window_params = [{transform_indices = @transform_0, window_bounds = array<i64: 32, 128>}, {pipeline_mode = #tpu.pipeline_mode<synchronous>, transform_indices = @transform_1, window_bounds = array<i64: 128, 256>}, {transform_indices = @transform_2, window_bounds = array<i64: 32, 256>}, {transform_indices = @transform_3, window_bounds = array<i64: 8, 256>}, {transform_indices = @transform_4, window_bounds = array<i64: 8, 256>}]} {
    %c0 = arith.constant 0 : index
    %c0_0 = arith.constant 0 : index
    %0 = vector.load %arg1[%c0, %c0_0] : memref<32x128xbf16, #tpu.memory_space<vmem>>, vector<32x128xbf16>
    %c0_1 = arith.constant 0 : index
    %c0_2 = arith.constant 0 : index
    %1 = vector.load %arg2[%c0_1, %c0_2] : memref<128x256xbf16, #tpu.memory_space<vmem>>, vector<128x256xbf16>
    %cst = arith.constant dense<0.000000e+00> : vector<32x256xf32>
    %2 = tpu.matmul %0, %1, %cst {dimension_numbers = #tpu.dot_dimension_numbers<[1], [0], [0], [1], [0, 0, 1, 1], [], []>} : vector<32x128xbf16>, vector<128x256xbf16>, vector<32x256xf32> -> vector<32x256xf32>
    %3 = arith.truncf %2 : vector<32x256xf32> to vector<32x256xbf16>
    %c0_3 = arith.constant 0 : index
    %c0_4 = arith.constant 0 : index
    %4 = vector.load %arg3[%c0_3, %c0_4] : memref<32x256xbf16, #tpu.memory_space<vmem>>, vector<32x256xbf16>
    tpu.vector_store %arg3[%c0_3, %c0_4], %3 {strides = array<i32>} : memref<32x256xbf16, #tpu.memory_space<vmem>>, vector<32x256xbf16>,
    %5 = arith.extf %3 : vector<32x256xbf16> to vector<32x256xf32>
    %6 = vector.shape_cast %5 : vector<32x256xf32> to vector<4x8x256xf32>
    %cst_5 = arith.constant dense<0.000000e+00> : vector<8x256xf32>
    %7 = vector.multi_reduction <add>, %6, %cst_5 [0] : vector<4x8x256xf32> to vector<8x256xf32>
    %c0_6 = arith.constant 0 : index
    %c0_7 = arith.constant 0 : index
    %8 = vector.load %arg4[%c0_6, %c0_7] : memref<8x256xf32, #tpu.memory_space<vmem>>, vector<8x256xf32>
    tpu.vector_store %arg4[%c0_6, %c0_7], %7 {strides = array<i32>} : memref<8x256xf32, #tpu.memory_space<vmem>>, vector<8x256xf32>,
    %9 = arith.mulf %6, %6 : vector<4x8x256xf32>
    %cst_8 = arith.constant dense<0.000000e+00> : vector<8x256xf32>
    %10 = vector.multi_reduction <add>, %9, %cst_8 [0] : vector<4x8x256xf32> to vector<8x256xf32>
    %c0_9 = arith.constant 0 : index
    %c0_10 = arith.constant 0 : index
    %11 = vector.load %arg5[%c0_9, %c0_10] : memref<8x256xf32, #tpu.memory_space<vmem>>, vector<8x256xf32>
    tpu.vector_store %arg5[%c0_9, %c0_10], %10 {strides = array<i32>} : memref<8x256xf32, #tpu.memory_space<vmem>>, vector<8x256xf32>,
    return
  }
  func.func @transform_0(%arg0: i32) -> (i32, i32) {
    %c0_i32 = arith.constant 0 : i32
    %c0_i32_0 = arith.constant 0 : i32
    return %arg0, %c0_i32 : i32, i32
  }
  func.func @transform_1(%arg0: i32) -> (i32, i32) {
    %c0_i32 = arith.constant 0 : i32
    %c0_i32_0 = arith.constant 0 : i32
    %c0_i32_1 = arith.constant 0 : i32
    return %c0_i32, %c0_i32_0 : i32, i32
  }
  func.func @transform_2(%arg0: i32) -> (i32, i32) {
    %c0_i32 = arith.constant 0 : i32
    %c0_i32_0 = arith.constant 0 : i32
    return %arg0, %c0_i32 : i32, i32
  }
  func.func @transform_3(%arg0: i32) -> (i32, i32) {
    %c0_i32 = arith.constant 0 : i32
    %c0_i32_0 = arith.constant 0 : i32
    return %arg0, %c0_i32 : i32, i32
  }
  func.func @transform_4(%arg0: i32) -> (i32, i32) {
    %c0_i32 = arith.constant 0 : i32
    %c0_i32_0 = arith.constant 0 : i32
    return %arg0, %c0_i32 : i32, i32
  }
}

module attributes {stable_mosaic.version = 11 : i64} {
  func.func @_bn_relu_matmul_kernel(%arg0: i32, %arg1: memref<32x256xbf16, #tpu.memory_space<vmem>>, %arg2: memref<1x256xbf16, #tpu.memory_space<vmem>>, %arg3: memref<1x256xbf16, #tpu.memory_space<vmem>>, %arg4: memref<256x128xbf16, #tpu.memory_space<vmem>>, %arg5: memref<1x128xf32, #tpu.memory_space<vmem>>, %arg6: memref<32x128xf32, #tpu.memory_space<vmem>>) attributes {dimension_semantics = [#tpu.dimension_semantics<parallel>], iteration_bounds = array<i64: 2>, scalar_prefetch = 0 : i64, scratch_operands = 0 : i64, tpu.core_type = #tpu.core_type<tc>, window_params = [{transform_indices = @transform_0, window_bounds = array<i64: 32, 256>}, {pipeline_mode = #tpu.pipeline_mode<synchronous>, transform_indices = @transform_1, window_bounds = array<i64: 1, 256>}, {pipeline_mode = #tpu.pipeline_mode<synchronous>, transform_indices = @transform_2, window_bounds = array<i64: 1, 256>}, {pipeline_mode = #tpu.pipeline_mode<synchronous>, transform_indices = @transform_3, window_bounds = array<i64: 256, 128>}, {pipeline_mode = #tpu.pipeline_mode<synchronous>, transform_indices = @transform_4, window_bounds = array<i64: 1, 128>}, {transform_indices = @transform_5, window_bounds = array<i64: 32, 128>}]} {
    %c0 = arith.constant 0 : index
    %c0_0 = arith.constant 0 : index
    %0 = vector.load %arg1[%c0, %c0_0] : memref<32x256xbf16, #tpu.memory_space<vmem>>, vector<32x256xbf16>
    %c0_1 = arith.constant 0 : index
    %c0_2 = arith.constant 0 : index
    %1 = vector.load %arg2[%c0_1, %c0_2] : memref<1x256xbf16, #tpu.memory_space<vmem>>, vector<1x256xbf16>
    %2 = vector.broadcast %1 : vector<1x256xbf16> to vector<32x256xbf16>
    %3 = arith.mulf %0, %2 : vector<32x256xbf16>
    %c0_3 = arith.constant 0 : index
    %c0_4 = arith.constant 0 : index
    %4 = vector.load %arg3[%c0_3, %c0_4] : memref<1x256xbf16, #tpu.memory_space<vmem>>, vector<1x256xbf16>
    %5 = vector.broadcast %4 : vector<1x256xbf16> to vector<32x256xbf16>
    %6 = arith.addf %3, %5 : vector<32x256xbf16>
    %cst = arith.constant 0.000000e+00 : bf16
    %7 = vector.broadcast %cst : bf16 to vector<32x256xbf16>
    %8 = arith.maximumf %6, %7 : vector<32x256xbf16>
    %c0_5 = arith.constant 0 : index
    %c0_6 = arith.constant 0 : index
    %9 = vector.load %arg4[%c0_5, %c0_6] : memref<256x128xbf16, #tpu.memory_space<vmem>>, vector<256x128xbf16>
    %cst_7 = arith.constant dense<0.000000e+00> : vector<32x128xf32>
    %10 = tpu.matmul %8, %9, %cst_7 {dimension_numbers = #tpu.dot_dimension_numbers<[1], [0], [0], [1], [0, 0, 1, 1], [], []>} : vector<32x256xbf16>, vector<256x128xbf16>, vector<32x128xf32> -> vector<32x128xf32>
    %c0_8 = arith.constant 0 : index
    %c0_9 = arith.constant 0 : index
    %11 = vector.load %arg5[%c0_8, %c0_9] : memref<1x128xf32, #tpu.memory_space<vmem>>, vector<1x128xf32>
    %12 = vector.broadcast %11 : vector<1x128xf32> to vector<32x128xf32>
    %13 = arith.addf %10, %12 : vector<32x128xf32>
    %c0_10 = arith.constant 0 : index
    %c0_11 = arith.constant 0 : index
    %14 = vector.load %arg6[%c0_10, %c0_11] : memref<32x128xf32, #tpu.memory_space<vmem>>, vector<32x128xf32>
    tpu.vector_store %arg6[%c0_10, %c0_11], %13 {strides = array<i32>} : memref<32x128xf32, #tpu.memory_space<vmem>>, vector<32x128xf32>,
    return
  }
  func.func @transform_0(%arg0: i32) -> (i32, i32) {
    %c0_i32 = arith.constant 0 : i32
    %c0_i32_0 = arith.constant 0 : i32
    return %arg0, %c0_i32 : i32, i32
  }
  func.func @transform_1(%arg0: i32) -> (i32, i32) {
    %c0_i32 = arith.constant 0 : i32
    %c0_i32_0 = arith.constant 0 : i32
    %c0_i32_1 = arith.constant 0 : i32
    return %c0_i32, %c0_i32_0 : i32, i32
  }
  func.func @transform_2(%arg0: i32) -> (i32, i32) {
    %c0_i32 = arith.constant 0 : i32
    %c0_i32_0 = arith.constant 0 : i32
    %c0_i32_1 = arith.constant 0 : i32
    return %c0_i32, %c0_i32_0 : i32, i32
  }
  func.func @transform_3(%arg0: i32) -> (i32, i32) {
    %c0_i32 = arith.constant 0 : i32
    %c0_i32_0 = arith.constant 0 : i32
    %c0_i32_1 = arith.constant 0 : i32
    return %c0_i32, %c0_i32_0 : i32, i32
  }
  func.func @transform_4(%arg0: i32) -> (i32, i32) {
    %c0_i32 = arith.constant 0 : i32
    %c0_i32_0 = arith.constant 0 : i32
    %c0_i32_1 = arith.constant 0 : i32
    return %c0_i32, %c0_i32_0 : i32, i32
  }
  func.func @transform_5(%arg0: i32) -> (i32, i32) {
    %c0_i32 = arith.constant 0 : i32
    %c0_i32_0 = arith.constant 0 : i32
    return %arg0, %c0_i32 : i32, i32
  }
}

</mosaic_0001>

<llo_original>
// kernel: mlp_forward.2
$region0: #{mlp_forward.2}
  #allocation0 [shape = 'u32[]', space=smem, size = 0x4, offset = 0x4, fixed_abs, tag = 'smem constant byte address 0x4 - core index']
  #allocation1 [shape = 'u32[144,128]{1,0:T(1,128)}', space=vmem, size = 0x12000, scoped, tag = 'internal scratch']
  %s0 = inlined_call_operand.vmem [shape: bf16[64,128], index: 0, kind: input, shape index: {}]
  %s1 = inlined_call_operand.vmem [shape: bf16[128,256], index: 1, kind: input, shape index: {}]
  %s2 = inlined_call_operand.vmem [shape: bf16[64,256], index: 2, kind: output, shape index: {0}]
  %s3 = inlined_call_operand.vmem [shape: f32[16,256], index: 3, kind: output, shape index: {1}]
  %s4 = inlined_call_operand.vmem [shape: f32[16,256], index: 4, kind: output, shape index: {2}]
  %5 = xla_tuple %s2, %s3, %s4
  %s6 = sld [smem:[#allocation0]]
  $region57: #{mlp_forward.2} parent=0
    _
  %s8 = ssub.s32 1, %s6
  %s9 = scalar_select 0, %s8, %s6
  loop: start=0, step=1, limit=4
  $region2: #{mlp_forward.2} parent=0 // loop_pre_header
    _
  $region3: #{mlp_forward.2} parent=0 // loop_header
    %s11 = sphi 0, %s15
    %p12 = scmp.ge.s32.totalorder %s11, 4
    %s21 = sphi 0, %s23
    %s24 = sphi 0, %s21
    %s25 = sphi 0, %s24
    %s41 = sphi 0, %s25
    %s45 = sphi 0, %s45
    %s47 = sphi 0, %s45
    %s48 = sphi 0, %s47
    %s62 = sphi 0, %s48
    %s68 = sphi 0, %s70
    %s71 = sphi 0, %s68
    %s72 = sphi 0, %s71
    %s88 = sphi 0, %s72
    %s94 = sphi 0, %s96
    %s97 = sphi 0, %s94
    %s98 = sphi 0, %s97
    %s114 = sphi 0, %s98
    %s120 = sphi 0, %s122
    %s123 = sphi 0, %s120
    %s124 = sphi 0, %s123
    %s140 = sphi 0, %s124
  $region4: #{mlp_forward.2} parent=0 // loop_header_branch
    %14 = sbr.rel (%p12) target = $region8
  $region5: #{mlp_forward.2} parent=0 // loop_body
    %s16 = ssub.s32 %s11, 1
    %s17 = ssub.s32 %s11, 2
    %s18 = sadd.s32 %s11, 1
    %s19 = ssub.s32 %s11, %s18
    %p20 = scmp.eq.s32.totalorder %s19, 0
    %s22 = sadd.s32 %s21, 1
    %s23 = scalar_select %p20, %s21, %s22
    %p26 = pneg %p20
    %p27 = scmp.eq.s32.totalorder %s11, 1
    %p28 = por %p26, %p27
    %p29 = scmp.ne.s32.totalorder %s21, %s24
    %p30 = scmp.eq.s32.totalorder %s11, 0
    %p31 = por %p29, %p30
    %p32 = scmp.ne.s32.totalorder %s21, %s24
    %p33 = scmp.eq.s32.totalorder %s16, 1
    %p34 = por %p32, %p33
    %p35 = scmp.ne.s32.totalorder %s24, %s25
    %p36 = scmp.eq.s32.totalorder %s16, 0
    %p37 = por %p35, %p36
    %p38 = scmp.ne.s32.totalorder %s24, %s25
    %p39 = scmp.eq.s32.totalorder %s17, 1
    %p40 = por %p38, %p39
    %p42 = scmp.ne.s32.totalorder %s25, %s41
    %p43 = scmp.eq.s32.totalorder %s17, 0
    %p44 = por %p42, %p43
    %s46 = sadd.s32 %s45, 1
    %p49 = scmp.eq.s32.totalorder %s11, 1
    %p50 = scmp.ne.s32.totalorder %s45, %s47
    %p51 = scmp.eq.s32.totalorder %s11, 0
    %p52 = por %p50, %p51
    %p53 = scmp.ne.s32.totalorder %s45, %s47
    %p54 = scmp.eq.s32.totalorder %s16, 1
    %p55 = por %p53, %p54
    %p56 = scmp.ne.s32.totalorder %s47, %s48
    %p57 = scmp.eq.s32.totalorder %s16, 0
    %p58 = por %p56, %p57
    %p59 = scmp.ne.s32.totalorder %s47, %s48
    %p60 = scmp.eq.s32.totalorder %s17, 1
    %p61 = por %p59, %p60
    %p63 = scmp.ne.s32.totalorder %s48, %s62
    %p64 = scmp.eq.s32.totalorder %s17, 0
    %p65 = por %p63, %p64
    %s66 = ssub.s32 %s11, %s18
    %p67 = scmp.eq.s32.totalorder %s66, 0
    %s69 = sadd.s32 %s68, 1
    %s70 = scalar_select %p67, %s68, %s69
    %p73 = pneg %p67
    %p74 = scmp.eq.s32.totalorder %s11, 1
    %p75 = por %p73, %p74
    %p76 = scmp.ne.s32.totalorder %s68, %s71
    %p77 = scmp.eq.s32.totalorder %s11, 0
    %p78 = por %p76, %p77
    %p79 = scmp.ne.s32.totalorder %s68, %s71
    %p80 = scmp.eq.s32.totalorder %s16, 1
    %p81 = por %p79, %p80
    %p82 = scmp.ne.s32.totalorder %s71, %s72
    %p83 = scmp.eq.s32.totalorder %s16, 0
    %p84 = por %p82, %p83
    %p85 = scmp.ne.s32.totalorder %s71, %s72
    %p86 = scmp.eq.s32.totalorder %s17, 1
    %p87 = por %p85, %p86
    %p89 = scmp.ne.s32.totalorder %s72, %s88
    %p90 = scmp.eq.s32.totalorder %s17, 0
    %p91 = por %p89, %p90
    %s92 = ssub.s32 %s11, %s18
    %p93 = scmp.eq.s32.totalorder %s92, 0
    %s95 = sadd.s32 %s94, 1
    %s96 = scalar_select %p93, %s94, %s95
    %p99 = pneg %p93
    %p100 = scmp.eq.s32.totalorder %s11, 1
    %p101 = por %p99, %p100
    %p102 = scmp.ne.s32.totalorder %s94, %s97
    %p103 = scmp.eq.s32.totalorder %s11, 0
    %p104 = por %p102, %p103
    %p105 = scmp.ne.s32.totalorder %s94, %s97
    %p106 = scmp.eq.s32.totalorder %s16, 1
    %p107 = por %p105, %p106
    %p108 = scmp.ne.s32.totalorder %s97, %s98
    %p109 = scmp.eq.s32.totalorder %s16, 0
    %p110 = por %p108, %p109
    %p111 = scmp.ne.s32.totalorder %s97, %s98
    %p112 = scmp.eq.s32.totalorder %s17, 1
    %p113 = por %p111, %p112
    %p115 = scmp.ne.s32.totalorder %s98, %s114
    %p116 = scmp.eq.s32.totalorder %s17, 0
    %p117 = por %p115, %p116
    %s118 = ssub.s32 %s11, %s18
    %p119 = scmp.eq.s32.totalorder %s118, 0
    %s121 = sadd.s32 %s120, 1
    %s122 = scalar_select %p119, %s120, %s121
    %p125 = pneg %p119
    %p126 = scmp.eq.s32.totalorder %s11, 1
    %p127 = por %p125, %p126
    %p128 = scmp.ne.s32.totalorder %s120, %s123
    %p129 = scmp.eq.s32.totalorder %s11, 0
    %p130 = por %p128, %p129
    %p131 = scmp.ne.s32.totalorder %s120, %s123
    %p132 = scmp.eq.s32.totalorder %s16, 1
    %p133 = por %p131, %p132
    %p134 = scmp.ne.s32.totalorder %s123, %s124
    %p135 = scmp.eq.s32.totalorder %s16, 0
    %p136 = por %p134, %p135
    %p137 = scmp.ne.s32.totalorder %s123, %s124
    %p138 = scmp.eq.s32.totalorder %s17, 1
    %p139 = por %p137, %p138
    %p141 = scmp.ne.s32.totalorder %s124, %s140
    %p142 = scmp.eq.s32.totalorder %s17, 0
    %p143 = por %p141, %p142
    %p144 = scmp.le.s32.totalorder 1, %s11
    %p145 = scmp.lt.s32.totalorder %s11, 3
    %p146 = pnand %p144, %p145
    %p147 = pneg %p146
    // Predicated region
    $region9: #{mlp_forward.2} parent=5 // pred_check
      _
    $region10: #{mlp_forward.2} parent=5 // pred_check_branch
      %149 = sbr.rel (%p146) target = $region12
    $region11: #{mlp_forward.2} parent=5 // pred_region
      %s150 = ssub.s32 %s11, 1
      // Predicated region
      $region13: #{mlp_forward.2} parent=11 // pred_check
        %p151 = pneg %p58
      $region14: #{mlp_forward.2} parent=11 // pred_check_branch
        %153 = sbr.rel (%p151) target = $region16
      $region15: #{mlp_forward.2} parent=11 // pred_region
        _
      $region16: #{mlp_forward.2} parent=11 // pred_fallthru
        _
    $region12: #{mlp_forward.2} parent=5 // pred_fallthru
      _
    %p154 = scmp.lt.s32.totalorder %s11, 2
    // Predicated region
    $region17: #{mlp_forward.2} parent=5 // pred_check
      %p155 = pneg %p154
    $region18: #{mlp_forward.2} parent=5 // pred_check_branch
      %157 = sbr.rel (%p155) target = $region20
    $region19: #{mlp_forward.2} parent=5 // pred_region
      // Predicated region
      $region21: #{mlp_forward.2} parent=19 // pred_check
        %p158 = pneg %p31
      $region22: #{mlp_forward.2} parent=19 // pred_check_branch
        %160 = sbr.rel (%p158) target = $region24
      $region23: #{mlp_forward.2} parent=19 // pred_region
        %s161 = smul.u32 4, %s11
        %p162 = scmp.lt.s32.totalorder %s161, 7
        %s163 = scalar_select %p162, %s161, 7
        %s164 = smul.addr %s163, 4
        %s165 = scalar_lea.vmem %s0, %s164
        %s166 = smul.u32 4, %s11
      $region24: #{mlp_forward.2} parent=19 // pred_fallthru
        _
    $region20: #{mlp_forward.2} parent=5 // pred_fallthru
      _
    %p167 = scmp.le.s32.totalorder 1, %s11
    %p168 = scmp.lt.s32.totalorder %s11, 3
    %p169 = pnand %p167, %p168
    %p170 = pneg %p169
    // Predicated region
    $region25: #{mlp_forward.2} parent=5 // pred_check
      _
    $region26: #{mlp_forward.2} parent=5 // pred_check_branch
      %172 = sbr.rel (%p169) target = $region28
    $region27: #{mlp_forward.2} parent=5 // pred_region
      %s173 = ssub.s32 %s11, 1
      %s174 = smul.u32 4, %s16
      %p175 = scmp.lt.s32.totalorder %s174, 7
      %s176 = scalar_select %p175, %s174, 7
      %s177 = smul.addr %s176, 4
      %s178 = scalar_lea.vmem %s0, %s177
      %p179 = pneg %p37
      %p180 = pneg %p34
      %p181 = pneg %p58
      %p182 = pneg %p55
      %p183 = pneg %p84
      %p184 = pneg %p81
      %s185 = smul.u32 4, %s16
      %p186 = scmp.lt.s32.totalorder %s185, 7
      %s187 = scalar_select %p186, %s185, 7
      %s188 = smul.addr %s187, 2
      %s189 = smul.addr %s188, 4
      %s190 = scalar_lea.vmem %s2, %s189
      %p191 = pneg %p110
      %p192 = pneg %p107
      %p193 = scmp.lt.s32.totalorder %s16, 1
      %s194 = scalar_select %p193, %s16, 1
      %s195 = smul.addr %s194, 2
      %s196 = smul.addr %s195, 8
      %s197 = scalar_lea.vmem %s3, %s196
      %p198 = pneg %p136
      %p199 = pneg %p133
      %p200 = scmp.lt.s32.totalorder %s16, 1
      %s201 = scalar_select %p200, %s16, 1
      %s202 = smul.addr %s201, 2
      %s203 = smul.addr %s202, 8
      %s204 = scalar_lea.vmem %s4, %s203
      %s205 = smul.u32 4, %s16
      %p206 = scmp.lt.s32.totalorder %s205, 7
      %s207 = scalar_select %p206, %s205, 7
      %s208 = smul.addr %s207, 4
      %s209 = scalar_lea.vmem %s0, %s208
      %s210 = smul.u32 4, %s16
      %s211 = smul.u32 4, %s16
      %p212 = scmp.lt.s32.totalorder %s211, 7
      %s213 = scalar_select %p212, %s211, 7
      %s214 = smul.addr %s213, 2
      %s215 = smul.addr %s214, 4
      %s216 = scalar_lea.vmem %s2, %s215
      %s217 = smul.u32 4, %s16
      %p218 = scmp.lt.s32.totalorder %s16, 1
      %s219 = scalar_select %p218, %s16, 1
      %s220 = smul.addr %s219, 2
      %s221 = smul.addr %s220, 8
      %s222 = scalar_lea.vmem %s3, %s221
      %p223 = scmp.lt.s32.totalorder %s16, 1
      %s224 = scalar_select %p223, %s16, 1
      %s225 = smul.addr %s224, 2
      %s226 = smul.addr %s225, 8
      %s227 = scalar_lea.vmem %s4, %s226
      %v229 = vld [vmem:[%s209] sm:$0xf]
      %v230 = vld [vmem:[%s209 + $0x4] sm:$0xf]
      %v231 = vld [vmem:[%s209 + $0x8] sm:$0xf]
      %v232 = vld [vmem:[%s209 + $0xc] sm:$0xf]
      %v233 = vld [vmem:[%s1] sm:$0xff]
      %v234 = vld [vmem:[%s1 + $0x8] sm:$0xff]
      %v235 = vld [vmem:[%s1 + $0x10] sm:$0xff]
      %v236 = vld [vmem:[%s1 + $0x18] sm:$0xff]
      %v237 = vld [vmem:[%s1 + $0x20] sm:$0xff]
      %v238 = vld [vmem:[%s1 + $0x28] sm:$0xff]
      %v239 = vld [vmem:[%s1 + $0x30] sm:$0xff]
      %v240 = vld [vmem:[%s1 + $0x38] sm:$0xff]
      %v241 = vld [vmem:[%s1 + $0x40] sm:$0xff]
      %v242 = vld [vmem:[%s1 + $0x48] sm:$0xff]
      %v243 = vld [vmem:[%s1 + $0x50] sm:$0xff]
      %v244 = vld [vmem:[%s1 + $0x58] sm:$0xff]
      %v245 = vld [vmem:[%s1 + $0x60] sm:$0xff]
      %v246 = vld [vmem:[%s1 + $0x68] sm:$0xff]
      %v247 = vld [vmem:[%s1 + $0x70] sm:$0xff]
      %v248 = vld [vmem:[%s1 + $0x78] sm:$0xff]
      %v253 = vunpack.c.l.b16 %v229
      %v254 = vunpack.c.l.b16 %v230
      %v255 = vunpack.c.l.b16 %v231
      %v256 = vunpack.c.l.b16 %v232
      %v257 = vpack.c.b16 %v254, %v253
      %v258 = vpack.c.b16 %v256, %v255
      %v277 = vunpack.c.l.b16 %v233
      %v278 = vunpack.c.h.b16 %v233
      %v279 = vunpack.c.l.b16 %v234
      %v280 = vunpack.c.h.b16 %v234
      %v281 = vunpack.c.l.b16 %v235
      %v282 = vunpack.c.h.b16 %v235
      %v283 = vunpack.c.l.b16 %v236
      %v284 = vunpack.c.h.b16 %v236
      %v285 = vunpack.c.l.b16 %v237
      %v286 = vunpack.c.h.b16 %v237
      %v287 = vunpack.c.l.b16 %v238
      %v288 = vunpack.c.h.b16 %v238
      %v289 = vunpack.c.l.b16 %v239
      %v290 = vunpack.c.h.b16 %v239
      %v291 = vunpack.c.l.b16 %v240
      %v292 = vunpack.c.h.b16 %v240
      %v293 = vunpack.c.l.b16 %v241
      %v294 = vunpack.c.h.b16 %v241
      %v295 = vunpack.c.l.b16 %v242
      %v296 = vunpack.c.h.b16 %v242
      %v297 = vunpack.c.l.b16 %v243
      %v298 = vunpack.c.h.b16 %v243
      %v299 = vunpack.c.l.b16 %v244
      %v300 = vunpack.c.h.b16 %v244
      %v301 = vunpack.c.l.b16 %v245
      %v302 = vunpack.c.h.b16 %v245
      %v303 = vunpack.c.l.b16 %v246
      %v304 = vunpack.c.h.b16 %v246
      %v305 = vunpack.c.l.b16 %v247
      %v306 = vunpack.c.h.b16 %v247
      %v307 = vunpack.c.l.b16 %v248
      %v308 = vunpack.c.h.b16 %v248
      %v309 = vpack.c.b16 %v279, %v277
      %v310 = vpack.c.b16 %v280, %v278
      %v311 = vpack.c.b16 %v283, %v281
      %v312 = vpack.c.b16 %v284, %v282
      %v313 = vpack.c.b16 %v287, %v285
      %v314 = vpack.c.b16 %v288, %v286
      %v315 = vpack.c.b16 %v291, %v289
      %v316 = vpack.c.b16 %v292, %v290
      %v317 = vpack.c.b16 %v295, %v293
      %v318 = vpack.c.b16 %v296, %v294
      %v319 = vpack.c.b16 %v299, %v297
      %v320 = vpack.c.b16 %v300, %v298
      %v321 = vpack.c.b16 %v303, %v301
      %v322 = vpack.c.b16 %v304, %v302
      %v323 = vpack.c.b16 %v307, %v305
      %v324 = vpack.c.b16 %v308, %v306
      %341 = vmatprep.subr.bf16.mxu0 %v324
      %342 = vmatpush1.bf16.msra.mxu0 %v323
      %343 = vmatprep.subr.bf16.mxu0 %v322
      %344 = vmatpush1.bf16.msra.mxu0 %v321
      %345 = vmatprep.subr.bf16.mxu0 %v320
      %346 = vmatpush1.bf16.msra.mxu0 %v319
      %347 = vmatprep.subr.bf16.mxu0 %v318
      %348 = vmatpush1.bf16.msra.mxu0 %v317
      %349 = vmatprep.subr.bf16.mxu0 %v316
      %350 = vmatpush1.bf16.msra.mxu0 %v315
      %351 = vmatprep.subr.bf16.mxu0 %v314
      %352 = vmatpush1.bf16.msra.mxu0 %v313
      %353 = vmatprep.subr.bf16.mxu0 %v312
      %354 = vmatpush1.bf16.msra.mxu0 %v311
      %355 = vmatprep.subr.bf16.mxu0 %v310
      %356 = vmatpush1.bf16.msra.mxu0 %v309
      %357 = vmatprep.subr.bf16.mxu0 0
      %358 = vmatpush2.bf16.msra.mxu0 0
      %359 = vmatprep.subr.bf16.mxu0 0
      %360 = vmatpush2.bf16.msra.mxu0 0
      %361 = vmatprep.subr.bf16.mxu0 0
      %362 = vmatpush2.bf16.msra.mxu0 0
      %363 = vmatprep.subr.bf16.mxu0 0
      %364 = vmatpush2.bf16.msra.mxu0 0
      %365 = vmatprep.subr.bf16.mxu0 0
      %366 = vmatpush2.bf16.msra.mxu0 0
      %367 = vmatprep.subr.bf16.mxu0 0
      %368 = vmatpush2.bf16.msra.mxu0 0
      %369 = vmatprep.subr.bf16.mxu0 0
      %370 = vmatpush2.bf16.msra.mxu0 0
      %371 = vmatprep.subr.bf16.mxu0 0
      %372 = vmatpush2.bf16.msra.mxu0 0
      %373 = vmatprep.mubr.bf16.mxu0 0
      %374 = vmatmul.mubr.bf16.gmra.mxu0 %v257
      %v375 = vpop.f32.mrf.mxu0
      %v376 = vadd.f32 0.0, %v375
      %v377 = vpop.f32.mrf.mxu0
      %v378 = vadd.f32 0.0, %v377
      %v379 = vpop.f32.mrf.mxu0
      %v380 = vadd.f32 0.0, %v379
      %v381 = vpop.f32.mrf.mxu0
      %v382 = vadd.f32 0.0, %v381
      %383 = vmatprep.mubr.bf16.mxu0 0
      %384 = vmatmul.mubr.bf16.gmra.mxu0 %v258
      %v385 = vpop.f32.mrf.mxu0
      %v386 = vadd.f32 0.0, %v385
      %v387 = vpop.f32.mrf.mxu0
      %v388 = vadd.f32 0.0, %v387
      %v389 = vpop.f32.mrf.mxu0
      %v390 = vadd.f32 0.0, %v389
      %v391 = vpop.f32.mrf.mxu0
      %v392 = vadd.f32 0.0, %v391
      %393 = vdwg.mxu0
      %v394 = vpack.c.bf16 %v380, %v376
      %v395 = vpack.c.bf16 %v382, %v378
      %v396 = vpack.c.bf16 %v390, %v386
      %v397 = vpack.c.bf16 %v392, %v388
      %v402 = vunpack.c.l.b16 %v394
      %v403 = vunpack.c.l.b16 %v395
      %v404 = vunpack.c.h.b16 %v394
      %v405 = vunpack.c.h.b16 %v395
      %v406 = vunpack.c.l.b16 %v396
      %v407 = vunpack.c.l.b16 %v397
      %v408 = vunpack.c.h.b16 %v396
      %v409 = vunpack.c.h.b16 %v397
      %v410 = vpack.c.b16 %v403, %v402
      %v411 = vpack.c.b16 %v405, %v404
      %v412 = vpack.c.b16 %v407, %v406
      %v413 = vpack.c.b16 %v409, %v408
      %418 = vst [vmem:[%s216] sm:$0xff] %v410
      %419 = vst [vmem:[%s216 + $0x8] sm:$0xff] %v411
      %420 = vst [vmem:[%s216 + $0x10] sm:$0xff] %v412
      %421 = vst [vmem:[%s216 + $0x18] sm:$0xff] %v413
      %v422 = vunpack.c.l.bf16 %v394
      %v423 = vunpack.c.l.bf16 %v395
      %v424 = vunpack.c.h.bf16 %v394
      %v425 = vunpack.c.h.bf16 %v395
      %v426 = vunpack.c.l.bf16 %v396
      %v427 = vunpack.c.l.bf16 %v397
      %v428 = vunpack.c.h.bf16 %v396
      %v429 = vunpack.c.h.bf16 %v397
      %v430 = vadd.f32 %v422, %v424
      %v431 = vadd.f32 %v430, %v426
      %v432 = vadd.f32 %v431, %v428
      %v433 = vadd.f32 %v423, %v425
      %v434 = vadd.f32 %v433, %v427
      %v435 = vadd.f32 %v434, %v429
      %436 = vst [vmem:[%s222] sm:$0xff] %v432
      %437 = vst [vmem:[%s222 + $0x8] sm:$0xff] %v435
      %v438 = vmul.f32 %v422, %v422
      %v439 = vmul.f32 %v423, %v423
      %v440 = vmul.f32 %v424, %v424
      %v441 = vmul.f32 %v425, %v425
      %v442 = vmul.f32 %v426, %v426
      %v443 = vmul.f32 %v427, %v427
      %v444 = vmul.f32 %v428, %v428
      %v445 = vmul.f32 %v429, %v429
      %v446 = vadd.f32 %v438, %v440
      %v447 = vadd.f32 %v446, %v442
      %v448 = vadd.f32 %v447, %v444
      %v449 = vadd.f32 %v439, %v441
      %v450 = vadd.f32 %v449, %v443
      %v451 = vadd.f32 %v450, %v445
      %452 = vst [vmem:[%s227] sm:$0xff] %v448
      %453 = vst [vmem:[%s227 + $0x8] sm:$0xff] %v451
      %s454 = smul.u32 4, %s16
      %p455 = scmp.lt.s32.totalorder %s454, 7
      %s456 = scalar_select %p455, %s454, 7
      %s457 = smul.addr %s456, 2
      %s458 = smul.addr %s457, 4
      %s459 = scalar_lea.vmem %s2, %s458
      %p460 = scmp.lt.s32.totalorder %s16, 1
      %s461 = scalar_select %p460, %s16, 1
      %s462 = smul.addr %s461, 2
      %s463 = smul.addr %s462, 8
      %s464 = scalar_lea.vmem %s3, %s463
      %p465 = scmp.lt.s32.totalorder %s16, 1
      %s466 = scalar_select %p465, %s16, 1
      %s467 = smul.addr %s466, 2
      %s468 = smul.addr %s467, 8
      %s469 = scalar_lea.vmem %s4, %s468
      // Predicated region
      $region29: #{mlp_forward.2} parent=27 // pred_check
        %p470 = pneg %p81
      $region30: #{mlp_forward.2} parent=27 // pred_check_branch
        %472 = sbr.rel (%p470) target = $region32
      $region31: #{mlp_forward.2} parent=27 // pred_region
        %s473 = smul.u32 4, %s16
      $region32: #{mlp_forward.2} parent=27 // pred_fallthru
        _
      // Predicated region
      $region33: #{mlp_forward.2} parent=27 // pred_check
        %p474 = pneg %p107
      $region34: #{mlp_forward.2} parent=27 // pred_check_branch
        %476 = sbr.rel (%p474) target = $region36
      $region35: #{mlp_forward.2} parent=27 // pred_region
        _
      $region36: #{mlp_forward.2} parent=27 // pred_fallthru
        _
      // Predicated region
      $region37: #{mlp_forward.2} parent=27 // pred_check
        %p477 = pneg %p133
      $region38: #{mlp_forward.2} parent=27 // pred_check_branch
        %479 = sbr.rel (%p477) target = $region40
      $region39: #{mlp_forward.2} parent=27 // pred_region
        _
      $region40: #{mlp_forward.2} parent=27 // pred_fallthru
        _
    $region28: #{mlp_forward.2} parent=5 // pred_fallthru
      _
    %p480 = scmp.le.s32.totalorder 2, %s11
    // Predicated region
    $region41: #{mlp_forward.2} parent=5 // pred_check
      %p481 = pneg %p480
    $region42: #{mlp_forward.2} parent=5 // pred_check_branch
      %483 = sbr.rel (%p481) target = $region44
    $region43: #{mlp_forward.2} parent=5 // pred_region
      %s484 = ssub.s32 %s11, 2
      // Predicated region
      $region45: #{mlp_forward.2} parent=43 // pred_check
        %p485 = pneg %p87
      $region46: #{mlp_forward.2} parent=43 // pred_check_branch
        %487 = sbr.rel (%p485) target = $region48
      $region47: #{mlp_forward.2} parent=43 // pred_region
        %s488 = smul.u32 4, %s17
        %p489 = scmp.lt.s32.totalorder %s488, 7
        %s490 = scalar_select %p489, %s488, 7
        %s491 = smul.addr %s490, 2
        %s492 = smul.addr %s491, 4
        %s493 = scalar_lea.vmem %s2, %s492
      $region48: #{mlp_forward.2} parent=43 // pred_fallthru
        _
      // Predicated region
      $region49: #{mlp_forward.2} parent=43 // pred_check
        %p494 = pneg %p113
      $region50: #{mlp_forward.2} parent=43 // pred_check_branch
        %496 = sbr.rel (%p494) target = $region52
      $region51: #{mlp_forward.2} parent=43 // pred_region
        %p497 = scmp.lt.s32.totalorder %s17, 1
        %s498 = scalar_select %p497, %s17, 1
        %s499 = smul.addr %s498, 2
        %s500 = smul.addr %s499, 8
        %s501 = scalar_lea.vmem %s3, %s500
      $region52: #{mlp_forward.2} parent=43 // pred_fallthru
        _
      // Predicated region
      $region53: #{mlp_forward.2} parent=43 // pred_check
        %p502 = pneg %p139
      $region54: #{mlp_forward.2} parent=43 // pred_check_branch
        %504 = sbr.rel (%p502) target = $region56
      $region55: #{mlp_forward.2} parent=43 // pred_region
        %p505 = scmp.lt.s32.totalorder %s17, 1
        %s506 = scalar_select %p505, %s17, 1
        %s507 = smul.addr %s506, 2
        %s508 = smul.addr %s507, 8
        %s509 = scalar_lea.vmem %s4, %s508
      $region56: #{mlp_forward.2} parent=43 // pred_fallthru
        _
    $region44: #{mlp_forward.2} parent=5 // pred_fallthru
      _
  $region6: #{mlp_forward.2} parent=0 // loop_footer
    %s15 = sadd.s32 1, %s11
  $region7: #{mlp_forward.2} parent=0 // loop_footer_branch
    %10 = sbr.rel target = $region3
  $region8: #{mlp_forward.2} parent=0 // loop_exit
    _

// kernel: mlp_forward.3
$region0: #{mlp_forward.3}
  #allocation0 [shape = 'u32[]', space=smem, size = 0x4, offset = 0x4, fixed_abs, tag = 'smem constant byte address 0x4 - core index']
  #allocation1 [shape = 'u32[144,128]{1,0:T(1,128)}', space=vmem, size = 0x12000, scoped, tag = 'internal scratch']
  %s0 = inlined_call_operand.vmem [shape: bf16[64,256], index: 0, kind: input, shape index: {}]
  %s1 = inlined_call_operand.vmem [shape: bf16[1,256], index: 1, kind: input, shape index: {}]
  %s2 = inlined_call_operand.vmem [shape: bf16[1,256], index: 2, kind: input, shape index: {}]
  %s3 = inlined_call_operand.vmem [shape: bf16[256,128], index: 3, kind: input, shape index: {}]
  %s4 = inlined_call_operand.vmem [shape: f32[1,128], index: 4, kind: input, shape index: {}]
  %s5 = inlined_call_operand.vmem [shape: f32[64,128], index: 5, kind: output, shape index: {}]
  %s6 = sld [smem:[#allocation0]]
  $region53: #{mlp_forward.3} parent=0
    _
  %s8 = ssub.s32 1, %s6
  %s9 = scalar_select 0, %s8, %s6
  loop: start=0, step=1, limit=4
  $region2: #{mlp_forward.3} parent=0 // loop_pre_header
    _
  $region3: #{mlp_forward.3} parent=0 // loop_header
    %s11 = sphi 0, %s15
    %p12 = scmp.ge.s32.totalorder %s11, 4
    %s21 = sphi 0, %s23
    %s24 = sphi 0, %s21
    %s25 = sphi 0, %s24
    %s41 = sphi 0, %s25
    %s45 = sphi 0, %s45
    %s47 = sphi 0, %s45
    %s48 = sphi 0, %s47
    %s62 = sphi 0, %s48
    %s66 = sphi 0, %s66
    %s68 = sphi 0, %s66
    %s69 = sphi 0, %s68
    %s83 = sphi 0, %s69
    %s87 = sphi 0, %s87
    %s89 = sphi 0, %s87
    %s90 = sphi 0, %s89
    %s104 = sphi 0, %s90
    %s108 = sphi 0, %s108
    %s110 = sphi 0, %s108
    %s111 = sphi 0, %s110
    %s125 = sphi 0, %s111
    %s131 = sphi 0, %s133
    %s134 = sphi 0, %s131
    %s135 = sphi 0, %s134
    %s151 = sphi 0, %s135
  $region4: #{mlp_forward.3} parent=0 // loop_header_branch
    %14 = sbr.rel (%p12) target = $region8
  $region5: #{mlp_forward.3} parent=0 // loop_body
    %s16 = ssub.s32 %s11, 1
    %s17 = ssub.s32 %s11, 2
    %s18 = sadd.s32 %s11, 1
    %s19 = ssub.s32 %s11, %s18
    %p20 = scmp.eq.s32.totalorder %s19, 0
    %s22 = sadd.s32 %s21, 1
    %s23 = scalar_select %p20, %s21, %s22
    %p26 = pneg %p20
    %p27 = scmp.eq.s32.totalorder %s11, 1
    %p28 = por %p26, %p27
    %p29 = scmp.ne.s32.totalorder %s21, %s24
    %p30 = scmp.eq.s32.totalorder %s11, 0
    %p31 = por %p29, %p30
    %p32 = scmp.ne.s32.totalorder %s21, %s24
    %p33 = scmp.eq.s32.totalorder %s16, 1
    %p34 = por %p32, %p33
    %p35 = scmp.ne.s32.totalorder %s24, %s25
    %p36 = scmp.eq.s32.totalorder %s16, 0
    %p37 = por %p35, %p36
    %p38 = scmp.ne.s32.totalorder %s24, %s25
    %p39 = scmp.eq.s32.totalorder %s17, 1
    %p40 = por %p38, %p39
    %p42 = scmp.ne.s32.totalorder %s25, %s41
    %p43 = scmp.eq.s32.totalorder %s17, 0
    %p44 = por %p42, %p43
    %s46 = sadd.s32 %s45, 1
    %p49 = scmp.eq.s32.totalorder %s11, 1
    %p50 = scmp.ne.s32.totalorder %s45, %s47
    %p51 = scmp.eq.s32.totalorder %s11, 0
    %p52 = por %p50, %p51
    %p53 = scmp.ne.s32.totalorder %s45, %s47
    %p54 = scmp.eq.s32.totalorder %s16, 1
    %p55 = por %p53, %p54
    %p56 = scmp.ne.s32.totalorder %s47, %s48
    %p57 = scmp.eq.s32.totalorder %s16, 0
    %p58 = por %p56, %p57
    %p59 = scmp.ne.s32.totalorder %s47, %s48
    %p60 = scmp.eq.s32.totalorder %s17, 1
    %p61 = por %p59, %p60
    %p63 = scmp.ne.s32.totalorder %s48, %s62
    %p64 = scmp.eq.s32.totalorder %s17, 0
    %p65 = por %p63, %p64
    %s67 = sadd.s32 %s66, 1
    %p70 = scmp.eq.s32.totalorder %s11, 1
    %p71 = scmp.ne.s32.totalorder %s66, %s68
    %p72 = scmp.eq.s32.totalorder %s11, 0
    %p73 = por %p71, %p72
    %p74 = scmp.ne.s32.totalorder %s66, %s68
    %p75 = scmp.eq.s32.totalorder %s16, 1
    %p76 = por %p74, %p75
    %p77 = scmp.ne.s32.totalorder %s68, %s69
    %p78 = scmp.eq.s32.totalorder %s16, 0
    %p79 = por %p77, %p78
    %p80 = scmp.ne.s32.totalorder %s68, %s69
    %p81 = scmp.eq.s32.totalorder %s17, 1
    %p82 = por %p80, %p81
    %p84 = scmp.ne.s32.totalorder %s69, %s83
    %p85 = scmp.eq.s32.totalorder %s17, 0
    %p86 = por %p84, %p85
    %s88 = sadd.s32 %s87, 1
    %p91 = scmp.eq.s32.totalorder %s11, 1
    %p92 = scmp.ne.s32.totalorder %s87, %s89
    %p93 = scmp.eq.s32.totalorder %s11, 0
    %p94 = por %p92, %p93
    %p95 = scmp.ne.s32.totalorder %s87, %s89
    %p96 = scmp.eq.s32.totalorder %s16, 1
    %p97 = por %p95, %p96
    %p98 = scmp.ne.s32.totalorder %s89, %s90
    %p99 = scmp.eq.s32.totalorder %s16, 0
    %p100 = por %p98, %p99
    %p101 = scmp.ne.s32.totalorder %s89, %s90
    %p102 = scmp.eq.s32.totalorder %s17, 1
    %p103 = por %p101, %p102
    %p105 = scmp.ne.s32.totalorder %s90, %s104
    %p106 = scmp.eq.s32.totalorder %s17, 0
    %p107 = por %p105, %p106
    %s109 = sadd.s32 %s108, 1
    %p112 = scmp.eq.s32.totalorder %s11, 1
    %p113 = scmp.ne.s32.totalorder %s108, %s110
    %p114 = scmp.eq.s32.totalorder %s11, 0
    %p115 = por %p113, %p114
    %p116 = scmp.ne.s32.totalorder %s108, %s110
    %p117 = scmp.eq.s32.totalorder %s16, 1
    %p118 = por %p116, %p117
    %p119 = scmp.ne.s32.totalorder %s110, %s111
    %p120 = scmp.eq.s32.totalorder %s16, 0
    %p121 = por %p119, %p120
    %p122 = scmp.ne.s32.totalorder %s110, %s111
    %p123 = scmp.eq.s32.totalorder %s17, 1
    %p124 = por %p122, %p123
    %p126 = scmp.ne.s32.totalorder %s111, %s125
    %p127 = scmp.eq.s32.totalorder %s17, 0
    %p128 = por %p126, %p127
    %s129 = ssub.s32 %s11, %s18
    %p130 = scmp.eq.s32.totalorder %s129, 0
    %s132 = sadd.s32 %s131, 1
    %s133 = scalar_select %p130, %s131, %s132
    %p136 = pneg %p130
    %p137 = scmp.eq.s32.totalorder %s11, 1
    %p138 = por %p136, %p137
    %p139 = scmp.ne.s32.totalorder %s131, %s134
    %p140 = scmp.eq.s32.totalorder %s11, 0
    %p141 = por %p139, %p140
    %p142 = scmp.ne.s32.totalorder %s131, %s134
    %p143 = scmp.eq.s32.totalorder %s16, 1
    %p144 = por %p142, %p143
    %p145 = scmp.ne.s32.totalorder %s134, %s135
    %p146 = scmp.eq.s32.totalorder %s16, 0
    %p147 = por %p145, %p146
    %p148 = scmp.ne.s32.totalorder %s134, %s135
    %p149 = scmp.eq.s32.totalorder %s17, 1
    %p150 = por %p148, %p149
    %p152 = scmp.ne.s32.totalorder %s135, %s151
    %p153 = scmp.eq.s32.totalorder %s17, 0
    %p154 = por %p152, %p153
    %p155 = scmp.le.s32.totalorder 1, %s11
    %p156 = scmp.lt.s32.totalorder %s11, 3
    %p157 = pnand %p155, %p156
    %p158 = pneg %p157
    // Predicated region
    $region9: #{mlp_forward.3} parent=5 // pred_check
      _
    $region10: #{mlp_forward.3} parent=5 // pred_check_branch
      %160 = sbr.rel (%p157) target = $region12
    $region11: #{mlp_forward.3} parent=5 // pred_region
      %s161 = ssub.s32 %s11, 1
      // Predicated region
      $region13: #{mlp_forward.3} parent=11 // pred_check
        %p162 = pneg %p58
      $region14: #{mlp_forward.3} parent=11 // pred_check_branch
        %164 = sbr.rel (%p162) target = $region16
      $region15: #{mlp_forward.3} parent=11 // pred_region
        _
      $region16: #{mlp_forward.3} parent=11 // pred_fallthru
        _
      // Predicated region
      $region17: #{mlp_forward.3} parent=11 // pred_check
        %p165 = pneg %p79
      $region18: #{mlp_forward.3} parent=11 // pred_check_branch
        %167 = sbr.rel (%p165) target = $region20
      $region19: #{mlp_forward.3} parent=11 // pred_region
        _
      $region20: #{mlp_forward.3} parent=11 // pred_fallthru
        _
      // Predicated region
      $region21: #{mlp_forward.3} parent=11 // pred_check
        %p168 = pneg %p100
      $region22: #{mlp_forward.3} parent=11 // pred_check_branch
        %170 = sbr.rel (%p168) target = $region24
      $region23: #{mlp_forward.3} parent=11 // pred_region
        _
      $region24: #{mlp_forward.3} parent=11 // pred_fallthru
        _
      // Predicated region
      $region25: #{mlp_forward.3} parent=11 // pred_check
        %p171 = pneg %p121
      $region26: #{mlp_forward.3} parent=11 // pred_check_branch
        %173 = sbr.rel (%p171) target = $region28
      $region27: #{mlp_forward.3} parent=11 // pred_region
        _
      $region28: #{mlp_forward.3} parent=11 // pred_fallthru
        _
    $region12: #{mlp_forward.3} parent=5 // pred_fallthru
      _
    %p174 = scmp.lt.s32.totalorder %s11, 2
    // Predicated region
    $region29: #{mlp_forward.3} parent=5 // pred_check
      %p175 = pneg %p174
    $region30: #{mlp_forward.3} parent=5 // pred_check_branch
      %177 = sbr.rel (%p175) target = $region32
    $region31: #{mlp_forward.3} parent=5 // pred_region
      // Predicated region
      $region33: #{mlp_forward.3} parent=31 // pred_check
        %p178 = pneg %p31
      $region34: #{mlp_forward.3} parent=31 // pred_check_branch
        %180 = sbr.rel (%p178) target = $region36
      $region35: #{mlp_forward.3} parent=31 // pred_region
        %s181 = smul.u32 4, %s11
        %p182 = scmp.lt.s32.totalorder %s181, 7
        %s183 = scalar_select %p182, %s181, 7
        %s184 = smul.addr %s183, 2
        %s185 = smul.addr %s184, 4
        %s186 = scalar_lea.vmem %s0, %s185
        %s187 = smul.u32 4, %s11
      $region36: #{mlp_forward.3} parent=31 // pred_fallthru
        _
    $region32: #{mlp_forward.3} parent=5 // pred_fallthru
      _
    %p188 = scmp.le.s32.totalorder 1, %s11
    %p189 = scmp.lt.s32.totalorder %s11, 3
    %p190 = pnand %p188, %p189
    %p191 = pneg %p190
    // Predicated region
    $region37: #{mlp_forward.3} parent=5 // pred_check
      _
    $region38: #{mlp_forward.3} parent=5 // pred_check_branch
      %193 = sbr.rel (%p190) target = $region40
    $region39: #{mlp_forward.3} parent=5 // pred_region
      %s194 = ssub.s32 %s11, 1
      %s195 = smul.u32 4, %s16
      %p196 = scmp.lt.s32.totalorder %s195, 7
      %s197 = scalar_select %p196, %s195, 7
      %s198 = smul.addr %s197, 2
      %s199 = smul.addr %s198, 4
      %s200 = scalar_lea.vmem %s0, %s199
      %p201 = pneg %p37
      %p202 = pneg %p34
      %p203 = pneg %p58
      %p204 = pneg %p55
      %p205 = pneg %p79
      %p206 = pneg %p76
      %p207 = pneg %p100
      %p208 = pneg %p97
      %p209 = pneg %p121
      %p210 = pneg %p118
      %p211 = pneg %p147
      %p212 = pneg %p144
      %s213 = smul.u32 4, %s16
      %p214 = scmp.lt.s32.totalorder %s213, 7
      %s215 = scalar_select %p214, %s213, 7
      %s216 = smul.addr %s215, 8
      %s217 = scalar_lea.vmem %s5, %s216
      %s218 = smul.u32 4, %s16
      %p219 = scmp.lt.s32.totalorder %s218, 7
      %s220 = scalar_select %p219, %s218, 7
      %s221 = smul.addr %s220, 2
      %s222 = smul.addr %s221, 4
      %s223 = scalar_lea.vmem %s0, %s222
      %s224 = smul.u32 4, %s16
      %s225 = smul.u32 4, %s16
      %p226 = scmp.lt.s32.totalorder %s225, 7
      %s227 = scalar_select %p226, %s225, 7
      %s228 = smul.addr %s227, 8
      %s229 = scalar_lea.vmem %s5, %s228
      %s230 = smul.u32 4, %s16
      %v232 = vld [vmem:[%s223] sm:$0xff]
      %v233 = vld [vmem:[%s223 + $0x8] sm:$0xff]
      %v234 = vld [vmem:[%s223 + $0x10] sm:$0xff]
      %v235 = vld [vmem:[%s223 + $0x18] sm:$0xff]
      %v236 = vld [vmem:[%s1] sm:$0x3]
      %v239 = vunpack.c.l.s4 1966171168
      %v240 = vunpack.c.0.s8 %v239
      %v241 = vlaneseq
      %v242 = vshrl.u32 %v241, 7
      %v243 = vsub.s32 %v240, %v242
      %v244 = vrot.slane %v236, %v243
      %v245 = vcombine.high %v244, %v244
      %v247 = vunpack.c.l.s4 1966171168
      %v248 = vunpack.c.0.s8 %v247
      %v249 = vlaneseq
      %v250 = vshrl.u32 %v249, 7
      %v251 = vsub.s32 %v248, %v250
      %v252 = vrot.slane %v244, %v251
      %v254 = vunpack.c.l.s4 1966171168
      %v255 = vunpack.c.0.s8 %v254
      %v256 = vlaneseq
      %v257 = vshrl.u32 %v256, 7
      %v258 = vsub.s32 %v255, %v257
      %v259 = vrot.slane %v245, %v258
      %v261 = vpack.i.b16 %v252, %v252
      %v263 = vlaneseq
      %v264 = vshrl.u32 %v263, 7
      %v265 = vsub.s32 0, %v264
      %v266 = vrot.slane %v261, %v265
      %v268 = vpack.i.b16 %v259, %v259
      %v270 = vlaneseq
      %v271 = vshrl.u32 %v270, 7
      %v272 = vsub.s32 0, %v271
      %v273 = vrot.slane %v268, %v272
      %v276 = vunpack.c.l.b16 %v266
      %v277 = vunpack.c.l.b16 %v273
      %v278 = vpack.c.b16 %v277, %v276
      %v280 = vmul.bf16 %v232, %v278
      %v281 = vmul.bf16 %v233, %v278
      %v282 = vmul.bf16 %v234, %v278
      %v283 = vmul.bf16 %v235, %v278
      %v284 = vld [vmem:[%s2] sm:$0x3]
      %v287 = vunpack.c.l.s4 1966171168
      %v288 = vunpack.c.0.s8 %v287
      %v289 = vlaneseq
      %v290 = vshrl.u32 %v289, 7
      %v291 = vsub.s32 %v288, %v290
      %v292 = vrot.slane %v284, %v291
      %v293 = vcombine.high %v292, %v292
      %v295 = vunpack.c.l.s4 1966171168
      %v296 = vunpack.c.0.s8 %v295
      %v297 = vlaneseq
      %v298 = vshrl.u32 %v297, 7
      %v299 = vsub.s32 %v296, %v298
      %v300 = vrot.slane %v292, %v299
      %v302 = vunpack.c.l.s4 1966171168
      %v303 = vunpack.c.0.s8 %v302
      %v304 = vlaneseq
      %v305 = vshrl.u32 %v304, 7
      %v306 = vsub.s32 %v303, %v305
      %v307 = vrot.slane %v293, %v306
      %v309 = vpack.i.b16 %v300, %v300
      %v311 = vlaneseq
      %v312 = vshrl.u32 %v311, 7
      %v313 = vsub.s32 0, %v312
      %v314 = vrot.slane %v309, %v313
      %v316 = vpack.i.b16 %v307, %v307
      %v318 = vlaneseq
      %v319 = vshrl.u32 %v318, 7
      %v320 = vsub.s32 0, %v319
      %v321 = vrot.slane %v316, %v320
      %v324 = vunpack.c.l.b16 %v314
      %v325 = vunpack.c.l.b16 %v321
      %v326 = vpack.c.b16 %v325, %v324
      %v328 = vadd.bf16 %v280, %v326
      %v329 = vadd.bf16 %v281, %v326
      %v330 = vadd.bf16 %v282, %v326
      %v331 = vadd.bf16 %v283, %v326
      %v332 = vmax.bf16 %v328, 0
      %v333 = vmax.bf16 %v329, 0
      %v334 = vmax.bf16 %v330, 0
      %v335 = vmax.bf16 %v331, 0
      %v336 = vld [vmem:[%s3] sm:$0xf]
      %v337 = vld [vmem:[%s3 + $0x4] sm:$0xf]
      %v338 = vld [vmem:[%s3 + $0x8] sm:$0xf]
      %v339 = vld [vmem:[%s3 + $0xc] sm:$0xf]
      %v340 = vld [vmem:[%s3 + $0x10] sm:$0xf]
      %v341 = vld [vmem:[%s3 + $0x14] sm:$0xf]
      %v342 = vld [vmem:[%s3 + $0x18] sm:$0xf]
      %v343 = vld [vmem:[%s3 + $0x1c] sm:$0xf]
      %v344 = vld [vmem:[%s3 + $0x20] sm:$0xf]
      %v345 = vld [vmem:[%s3 + $0x24] sm:$0xf]
      %v346 = vld [vmem:[%s3 + $0x28] sm:$0xf]
      %v347 = vld [vmem:[%s3 + $0x2c] sm:$0xf]
      %v348 = vld [vmem:[%s3 + $0x30] sm:$0xf]
      %v349 = vld [vmem:[%s3 + $0x34] sm:$0xf]
      %v350 = vld [vmem:[%s3 + $0x38] sm:$0xf]
      %v351 = vld [vmem:[%s3 + $0x3c] sm:$0xf]
      %v352 = vld [vmem:[%s3 + $0x40] sm:$0xf]
      %v353 = vld [vmem:[%s3 + $0x44] sm:$0xf]
      %v354 = vld [vmem:[%s3 + $0x48] sm:$0xf]
      %v355 = vld [vmem:[%s3 + $0x4c] sm:$0xf]
      %v356 = vld [vmem:[%s3 + $0x50] sm:$0xf]
      %v357 = vld [vmem:[%s3 + $0x54] sm:$0xf]
      %v358 = vld [vmem:[%s3 + $0x58] sm:$0xf]
      %v359 = vld [vmem:[%s3 + $0x5c] sm:$0xf]
      %v360 = vld [vmem:[%s3 + $0x60] sm:$0xf]
      %v361 = vld [vmem:[%s3 + $0x64] sm:$0xf]
      %v362 = vld [vmem:[%s3 + $0x68] sm:$0xf]
      %v363 = vld [vmem:[%s3 + $0x6c] sm:$0xf]
      %v364 = vld [vmem:[%s3 + $0x70] sm:$0xf]
      %v365 = vld [vmem:[%s3 + $0x74] sm:$0xf]
      %v366 = vld [vmem:[%s3 + $0x78] sm:$0xf]
      %v367 = vld [vmem:[%s3 + $0x7c] sm:$0xf]
      %v368 = vld [vmem:[%s4] sm:$0x1]
      %v370 = vlaneseq
      %v371 = vshrl.u32 %v370, 7
      %v372 = vsub.s32 0, %v371
      %v373 = vrot.slane %v368, %v372
      %v379 = vunpack.c.l.b16 %v332
      %v380 = vunpack.c.h.b16 %v332
      %v381 = vunpack.c.l.b16 %v333
      %v382 = vunpack.c.h.b16 %v333
      %v383 = vunpack.c.l.b16 %v334
      %v384 = vunpack.c.h.b16 %v334
      %v385 = vunpack.c.l.b16 %v335
      %v386 = vunpack.c.h.b16 %v335
      %v387 = vpack.c.b16 %v381, %v379
      %v388 = vpack.c.b16 %v382, %v380
      %v389 = vpack.c.b16 %v385, %v383
      %v390 = vpack.c.b16 %v386, %v384
      %v427 = vunpack.c.l.b16 %v336
      %v428 = vunpack.c.l.b16 %v337
      %v429 = vunpack.c.l.b16 %v338
      %v430 = vunpack.c.l.b16 %v339
      %v431 = vunpack.c.l.b16 %v340
      %v432 = vunpack.c.l.b16 %v341
      %v433 = vunpack.c.l.b16 %v342
      %v434 = vunpack.c.l.b16 %v343
      %v435 = vunpack.c.l.b16 %v344
      %v436 = vunpack.c.l.b16 %v345
      %v437 = vunpack.c.l.b16 %v346
      %v438 = vunpack.c.l.b16 %v347
      %v439 = vunpack.c.l.b16 %v348
      %v440 = vunpack.c.l.b16 %v349
      %v441 = vunpack.c.l.b16 %v350
      %v442 = vunpack.c.l.b16 %v351
      %v443 = vunpack.c.l.b16 %v352
      %v444 = vunpack.c.l.b16 %v353
      %v445 = vunpack.c.l.b16 %v354
      %v446 = vunpack.c.l.b16 %v355
      %v447 = vunpack.c.l.b16 %v356
      %v448 = vunpack.c.l.b16 %v357
      %v449 = vunpack.c.l.b16 %v358
      %v450 = vunpack.c.l.b16 %v359
      %v451 = vunpack.c.l.b16 %v360
      %v452 = vunpack.c.l.b16 %v361
      %v453 = vunpack.c.l.b16 %v362
      %v454 = vunpack.c.l.b16 %v363
      %v455 = vunpack.c.l.b16 %v364
      %v456 = vunpack.c.l.b16 %v365
      %v457 = vunpack.c.l.b16 %v366
      %v458 = vunpack.c.l.b16 %v367
      %v459 = vpack.c.b16 %v428, %v427
      %v460 = vpack.c.b16 %v430, %v429
      %v461 = vpack.c.b16 %v432, %v431
      %v462 = vpack.c.b16 %v434, %v433
      %v463 = vpack.c.b16 %v436, %v435
      %v464 = vpack.c.b16 %v438, %v437
      %v465 = vpack.c.b16 %v440, %v439
      %v466 = vpack.c.b16 %v442, %v441
      %v467 = vpack.c.b16 %v444, %v443
      %v468 = vpack.c.b16 %v446, %v445
      %v469 = vpack.c.b16 %v448, %v447
      %v470 = vpack.c.b16 %v450, %v449
      %v471 = vpack.c.b16 %v452, %v451
      %v472 = vpack.c.b16 %v454, %v453
      %v473 = vpack.c.b16 %v456, %v455
      %v474 = vpack.c.b16 %v458, %v457
      %491 = vmatprep.subr.bf16.mxu0 0
      %492 = vmatpush1.bf16.msra.mxu0 %v466
      %493 = vmatprep.subr.bf16.mxu0 0
      %494 = vmatpush1.bf16.msra.mxu0 %v465
      %495 = vmatprep.subr.bf16.mxu0 0
      %496 = vmatpush1.bf16.msra.mxu0 %v464
      %497 = vmatprep.subr.bf16.mxu0 0
      %498 = vmatpush1.bf16.msra.mxu0 %v463
      %499 = vmatprep.subr.bf16.mxu0 0
      %500 = vmatpush1.bf16.msra.mxu0 %v462
      %501 = vmatprep.subr.bf16.mxu0 0
      %502 = vmatpush1.bf16.msra.mxu0 %v461
      %503 = vmatprep.subr.bf16.mxu0 0
      %504 = vmatpush1.bf16.msra.mxu0 %v460
      %505 = vmatprep.subr.bf16.mxu0 0
      %506 = vmatpush1.bf16.msra.mxu0 %v459
      %507 = vmatprep.subr.bf16.mxu0 0
      %508 = vmatpush2.bf16.msra.mxu0 %v474
      %509 = vmatprep.subr.bf16.mxu0 0
      %510 = vmatpush2.bf16.msra.mxu0 %v473
      %511 = vmatprep.subr.bf16.mxu0 0
      %512 = vmatpush2.bf16.msra.mxu0 %v472
      %513 = vmatprep.subr.bf16.mxu0 0
      %514 = vmatpush2.bf16.msra.mxu0 %v471
      %515 = vmatprep.subr.bf16.mxu0 0
      %516 = vmatpush2.bf16.msra.mxu0 %v470
      %517 = vmatprep.subr.bf16.mxu0 0
      %518 = vmatpush2.bf16.msra.mxu0 %v469
      %519 = vmatprep.subr.bf16.mxu0 0
      %520 = vmatpush2.bf16.msra.mxu0 %v468
      %521 = vmatprep.subr.bf16.mxu0 0
      %522 = vmatpush2.bf16.msra.mxu0 %v467
      %523 = vmatprep.mubr.bf16.mxu0 %v388
      %524 = vmatmul.mubr.bf16.gmra.mxu0 %v387
      %v525 = vpop.f32.mrf.mxu0
      %v526 = vadd.f32 %v373, %v525
      %v527 = vpop.f32.mrf.mxu0
      %v528 = vpop.f32.mrf.mxu0
      %v529 = vadd.f32 %v373, %v528
      %v530 = vpop.f32.mrf.mxu0
      %531 = vmatprep.mubr.bf16.mxu0 %v390
      %532 = vmatmul.mubr.bf16.gmra.mxu0 %v389
      %v533 = vpop.f32.mrf.mxu0
      %v534 = vadd.f32 %v373, %v533
      %v535 = vpop.f32.mrf.mxu0
      %v536 = vpop.f32.mrf.mxu0
      %v537 = vadd.f32 %v373, %v536
      %v538 = vpop.f32.mrf.mxu0
      %539 = vdwg.mxu0
      %540 = vst [vmem:[%s229] sm:$0xff] %v526
      %541 = vst [vmem:[%s229 + $0x8] sm:$0xff] %v529
      %542 = vst [vmem:[%s229 + $0x10] sm:$0xff] %v534
      %543 = vst [vmem:[%s229 + $0x18] sm:$0xff] %v537
      %s544 = smul.u32 4, %s16
      %p545 = scmp.lt.s32.totalorder %s544, 7
      %s546 = scalar_select %p545, %s544, 7
      %s547 = smul.addr %s546, 8
      %s548 = scalar_lea.vmem %s5, %s547
      // Predicated region
      $region41: #{mlp_forward.3} parent=39 // pred_check
        %p549 = pneg %p144
      $region42: #{mlp_forward.3} parent=39 // pred_check_branch
        %551 = sbr.rel (%p549) target = $region44
      $region43: #{mlp_forward.3} parent=39 // pred_region
        %s552 = smul.u32 4, %s16
      $region44: #{mlp_forward.3} parent=39 // pred_fallthru
        _
    $region40: #{mlp_forward.3} parent=5 // pred_fallthru
      _
    %p553 = scmp.le.s32.totalorder 2, %s11
    // Predicated region
    $region45: #{mlp_forward.3} parent=5 // pred_check
      %p554 = pneg %p553
    $region46: #{mlp_forward.3} parent=5 // pred_check_branch
      %556 = sbr.rel (%p554) target = $region48
    $region47: #{mlp_forward.3} parent=5 // pred_region
      %s557 = ssub.s32 %s11, 2
      // Predicated region
      $region49: #{mlp_forward.3} parent=47 // pred_check
        %p558 = pneg %p150
      $region50: #{mlp_forward.3} parent=47 // pred_check_branch
        %560 = sbr.rel (%p558) target = $region52
      $region51: #{mlp_forward.3} parent=47 // pred_region
        %s561 = smul.u32 4, %s17
        %p562 = scmp.lt.s32.totalorder %s561, 7
        %s563 = scalar_select %p562, %s561, 7
        %s564 = smul.addr %s563, 8
        %s565 = scalar_lea.vmem %s5, %s564
      $region52: #{mlp_forward.3} parent=47 // pred_fallthru
        _
    $region48: #{mlp_forward.3} parent=5 // pred_fallthru
      _
  $region6: #{mlp_forward.3} parent=0 // loop_footer
    %s15 = sadd.s32 1, %s11
  $region7: #{mlp_forward.3} parent=0 // loop_footer_branch
    %10 = sbr.rel target = $region3
  $region8: #{mlp_forward.3} parent=0 // loop_exit
    _

</llo_original>
